<compile_context>
chip_gen: v7x
topology: tpu7x:2x2x1
jax: 0.10.0
libtpu: 0.0.40
codegen_flags: <defaults>
</compile_context>

<pallas_src>
import math
from functools import partial

import jax
import jax.numpy as jnp
from jax.experimental import pallas as pl
from jax.experimental.pallas import tpu as pltpu


def _round_up(x, m):
    return ((x + m - 1) // m) * m


# ---------------------------------------------------------------------------
# Kernel
# ---------------------------------------------------------------------------
def _mlp_kernel(x_ref, w1_ref, w2_ref, w3_ref, b_ref, o_ref):
    """3-layer MLP (linear+relu, linear+relu, linear) on one batch tile.

    x_ref:  (rows, d_in)   unpadded activation tile, f32
    w1_ref: (Dp, Hp), w2_ref: (Hp, Hp), w3_ref: (Hp, Op)  zero-padded weights
            (f32 or bf16 -- dots run in the weight dtype, accumulate in f32)
    b_ref:  (3, W) packed f32 bias rows [b1; b2; b3], W = max(Hp, Op)
    o_ref:  (rows_out, Op) lane-dense f32 output tile
    """
    dp, hp = w1_ref.shape
    op = w3_ref.shape[1]
    rows_out = o_ref.shape[0]

    x = x_ref[...].astype(jnp.float32)
    rows, d_in = x.shape
    # Zero-extend to an (8,128)-aligned tile in vregs (no VMEM scratch,
    # no partial stores); padded rows/lanes multiply zero weight rows.
    x = jnp.pad(x, ((0, rows_out - rows), (0, dp - d_in)))

    b1 = b_ref[0:1, 0:hp]
    b2 = b_ref[1:2, 0:hp]
    b3 = b_ref[2:3, 0:op]

    w_dtype = w1_ref.dtype
    h1 = jnp.dot(x.astype(w_dtype), w1_ref[...],
                 preferred_element_type=jnp.float32) + b1
    h1 = jnp.maximum(h1, 0.0)
    h2 = jnp.dot(h1.astype(w_dtype), w2_ref[...],
                 preferred_element_type=jnp.float32) + b2
    h2 = jnp.maximum(h2, 0.0)
    a = jnp.dot(h2.astype(w_dtype), w3_ref[...],
                preferred_element_type=jnp.float32) + b3
    o_ref[...] = a.astype(o_ref.dtype)


# ---------------------------------------------------------------------------
# Parameter preparation (one-time, hoisted out of the forward pass)
# ---------------------------------------------------------------------------
def prepare_actor_params(params, mxu_dtype=jnp.float32):
    """Pad (and optionally down-cast) parameters to TPU tiles ONCE.

    mxu_dtype=jnp.bfloat16 is recommended on v6e/v7x (bf16-native MXU);
    jnp.float32 keeps bit-close parity with the reference (v5e / debugging).
    """
    w1, b1, w2, b2, w3, b3 = params
    d_in, h = w1.shape
    o = w3.shape[1]
    dp = _round_up(max(d_in, 128), 128)
    hp = _round_up(max(h, 128), 128)
    op = _round_up(max(o, 128), 128)
    w = max(hp, op)

    w1p = jnp.zeros((dp, hp), jnp.float32).at[:d_in, :h].set(w1).astype(mxu_dtype)
    w2p = jnp.zeros((hp, hp), jnp.float32).at[:h, :h].set(w2).astype(mxu_dtype)
    w3p = jnp.zeros((hp, op), jnp.float32).at[:h, :o].set(w3).astype(mxu_dtype)
    bp = (jnp.zeros((3, w), jnp.float32)      # biases stay f32 (added post-MXU)
          .at[0, :h].set(b1)
          .at[1, :h].set(b2)
          .at[2, :o].set(b3))
    return {"w1p": w1p, "w2p": w2p, "w3p": w3p, "bp": bp}


# ---------------------------------------------------------------------------
# Forward paths
# ---------------------------------------------------------------------------
def _forward_small(x, pp):
    """Single-invocation path: whole problem as one VMEM-resident block."""
    B, _ = x.shape
    Bp = _round_up(max(B, 8), 8)
    Op = pp["w3p"].shape[1]
    vmem = pl.BlockSpec(memory_space=pltpu.MemorySpace.VMEM)
    return pl.pallas_call(
        _mlp_kernel,
        out_shape=jax.ShapeDtypeStruct((Bp, Op), jnp.float32),
        in_specs=[vmem] * 5,
        out_specs=vmem,
    )(x, pp["w1p"], pp["w2p"], pp["w3p"], pp["bp"])


def _forward_tiled(x, pp, tb):
    """Batch-tiled path for large batches: weights VMEM-resident, batch tiles
    pipelined and sharded across cores ("parallel"); cdiv grid, no wrapper pad
    (Pallas masks the partial last block; its garbage rows are row-local)."""
    B, d_in = x.shape
    Op = pp["w3p"].shape[1]
    return pl.pallas_call(
        _mlp_kernel,
        out_shape=jax.ShapeDtypeStruct((B, Op), jnp.float32),
        grid=(pl.cdiv(B, tb),),
        in_specs=[
            pl.BlockSpec((tb, d_in), lambda i: (i, 0)),       # activations
            pl.BlockSpec(pp["w1p"].shape, lambda i: (0, 0)),  # resident weights
            pl.BlockSpec(pp["w2p"].shape, lambda i: (0, 0)),
            pl.BlockSpec(pp["w3p"].shape, lambda i: (0, 0)),
            pl.BlockSpec(pp["bp"].shape, lambda i: (0, 0)),
        ],
        out_specs=pl.BlockSpec((tb, Op), lambda i: (i, 0)),
        compiler_params=pltpu.CompilerParams(
            dimension_semantics=("parallel",)),
    )(x, pp["w1p"], pp["w2p"], pp["w3p"], pp["bp"])


def _dispatch(state, padded_params, single_max_b, tile_b):
    if state.ndim == 3:
        state = jnp.squeeze(state, axis=1)
    state = state.astype(jnp.float32)
    B = state.shape[0]
    # On v7x (2 TensorCores) consider single_max_b ~ 512 so the "parallel"
    # tiled grid keeps both cores busy.
    if B <= single_max_b:
        return _forward_small(state, padded_params)
    return _forward_tiled(state, padded_params, tile_b)


@partial(jax.jit, static_argnames=("n_output", "single_max_b", "tile_b"))
def actor_forward_padded(state, padded_params, *, n_output,
                         single_max_b=1024, tile_b=256):
    """Returns the lane-dense padded output (rows >= B, 128 lanes); slice
    [:B, :n_output] at the point of use so XLA fuses it into the consumer."""
    del n_output  # kept for signature parity
    return _dispatch(state, padded_params, single_max_b, tile_b)


@partial(jax.jit, static_argnames=("n_output", "single_max_b", "tile_b"))
def actor_forward(state, padded_params, *, n_output,
                  single_max_b=1024, tile_b=256):
    """state: (B, 1, D_in) or (B, D_in). Returns (B, n_output) float32."""
    B = state.shape[0]
    out = _dispatch(state, padded_params, single_max_b, tile_b)
    return out[:B, :n_output]


# ---------------------------------------------------------------------------
# Init (matches the torch module's init scheme) and pure-JAX reference
# ---------------------------------------------------------------------------
def _xavier_uniform(key, fan_in, fan_out, gain):
    limit = gain * math.sqrt(6.0 / (fan_in + fan_out))
    # Stored as (in, out); same linear map as torch's (out, in) with x @ W.T.
    return jax.random.uniform(key, (fan_in, fan_out), jnp.float32, -limit, limit)


def _linear_bias(key, fan_in, fan_out):
    bound = 1.0 / math.sqrt(fan_in)
    return jax.random.uniform(key, (fan_out,), jnp.float32, -bound, bound)


def init_actor_params(key, n_input, n_features, n_output):
    k1, k2, k3, k4, k5, k6 = jax.random.split(key, 6)
    w1 = _xavier_uniform(k1, n_input, n_features, math.sqrt(2.0))
    b1 = _linear_bias(k2, n_input, n_features)
    w2 = _xavier_uniform(k3, n_features, n_features, math.sqrt(2.0))
    b2 = _linear_bias(k4, n_features, n_features)
    w3 = _xavier_uniform(k5, n_features, n_output, 1.0)
    b3 = _linear_bias(k6, n_features, n_output)
    return (w1, b1, w2, b2, w3, b3)


def _reference_forward(state, params):
    w1, b1, w2, b2, w3, b3 = params
    x = jnp.squeeze(state, 1).astype(jnp.float32)
    h1 = jnp.maximum(x @ w1 + b1, 0.0)
    h2 = jnp.maximum(h1 @ w2 + b2, 0.0)
    return h2 @ w3 + b3


if __name__ == "__main__":
    key = jax.random.PRNGKey(0)
    kp, kx, kx2 = jax.random.split(key, 3)

    # Pendulum-like sizes: obs dim 3, action dim 1, 32 hidden features.
    n_input, n_features, n_output = 3, 32, 1
    params = init_actor_params(kp, n_input, n_features, n_output)

    pp_f32 = prepare_actor_params(params)                             # bit-close / v5e
    pp_bf16 = prepare_actor_params(params, mxu_dtype=jnp.bfloat16)    # v6e/v7x MXU-native

    # --- small-batch (action generation) path, B = 2, f32 weights ---
    batch = 2
    state = jax.random.normal(kx, (batch, 1, n_input), jnp.float32)
    out = actor_forward(state, pp_f32, n_output=n_output)
    jax.block_until_ready(out)
    ref = _reference_forward(state, params)
    assert out.shape == (batch, n_output)
    assert jnp.allclose(out, ref, atol=1e-5, rtol=1e-5)

    # Same path with bf16 weights (fast MXU path on v6e/v7x), looser tolerance.
    out_bf16 = actor_forward(state, pp_bf16, n_output=n_output)
    jax.block_until_ready(out_bf16)
    assert jnp.allclose(out_bf16, ref, atol=1e-1, rtol=1e-1)

    # --- training-size batch: tiled "parallel" path; B intentionally NOT a
    #     multiple of the tile so the cdiv grid's masked last block is used ---
    big_batch = 1300
    state_big = jax.random.normal(kx2, (big_batch, 1, n_input), jnp.float32)
    out_big = actor_forward(state_big, pp_f32, n_output=n_output,
                            single_max_b=1024, tile_b=256)
    jax.block_until_ready(out_big)
    ref_big = _reference_forward(state_big, params)
    assert out_big.shape == (big_batch, n_output)
    assert jnp.allclose(out_big, ref_big, atol=1e-4, rtol=1e-4)

    print("KERNEL_OK")
</pallas_src>

<mosaic_0001>
module attributes {stable_mosaic.version = 11 : i64} {
  func.func @_mlp_kernel(%arg0: memref<2x3xf32, #tpu.memory_space<vmem>>, %arg1: memref<128x128xf32, #tpu.memory_space<vmem>>, %arg2: memref<128x128xf32, #tpu.memory_space<vmem>>, %arg3: memref<128x128xf32, #tpu.memory_space<vmem>>, %arg4: memref<3x128xf32, #tpu.memory_space<vmem>>, %arg5: memref<8x128xf32, #tpu.memory_space<vmem>>) attributes {dimension_semantics = [], scalar_prefetch = 0 : i64, scratch_operands = 0 : i64, tpu.core_type = #tpu.core_type<tc>} {
    %c0 = arith.constant 0 : index
    %c0_0 = arith.constant 0 : index
    %0 = vector.load %arg0[%c0, %c0_0] : memref<2x3xf32, #tpu.memory_space<vmem>>, vector<2x3xf32>
    %c0_i32 = arith.constant 0 : i32
    %1 = arith.sitofp %c0_i32 : i32 to f32
    %2 = vector.broadcast %1 : f32 to vector<6x3xf32>
    %3 = tpu.concatenate %0, %2 in 0 : vector<2x3xf32>, vector<6x3xf32> -> vector<8x3xf32>
    %4 = vector.broadcast %1 : f32 to vector<8x125xf32>
    %5 = tpu.concatenate %3, %4 in 1 : vector<8x3xf32>, vector<8x125xf32> -> vector<8x128xf32>
    %c0_1 = arith.constant 0 : index
    %c0_2 = arith.constant 0 : index
    %6 = vector.load %arg4[%c0_1, %c0_2] : memref<3x128xf32, #tpu.memory_space<vmem>>, vector<1x128xf32>
    %c1 = arith.constant 1 : index
    %c0_3 = arith.constant 0 : index
    %7 = vector.load %arg4[%c1, %c0_3] : memref<3x128xf32, #tpu.memory_space<vmem>>, vector<1x128xf32>
    %c2 = arith.constant 2 : index
    %c0_4 = arith.constant 0 : index
    %8 = vector.load %arg4[%c2, %c0_4] : memref<3x128xf32, #tpu.memory_space<vmem>>, vector<1x128xf32>
    %c0_5 = arith.constant 0 : index
    %c0_6 = arith.constant 0 : index
    %9 = vector.load %arg1[%c0_5, %c0_6] : memref<128x128xf32, #tpu.memory_space<vmem>>, vector<128x128xf32>
    %cst = arith.constant dense<0.000000e+00> : vector<8x128xf32>
    %10 = tpu.matmul %5, %9, %cst {dimension_numbers = #tpu.dot_dimension_numbers<[1], [0], [0], [1], [0, 0, 1, 1], [], []>} : vector<8x128xf32>, vector<128x128xf32>, vector<8x128xf32> -> vector<8x128xf32>
    %11 = vector.broadcast %6 : vector<1x128xf32> to vector<8x128xf32>
    %12 = arith.addf %10, %11 : vector<8x128xf32>
    %cst_7 = arith.constant 0.000000e+00 : f32
    %13 = vector.broadcast %cst_7 : f32 to vector<8x128xf32>
    %14 = arith.maximumf %12, %13 : vector<8x128xf32>
    %c0_8 = arith.constant 0 : index
    %c0_9 = arith.constant 0 : index
    %15 = vector.load %arg2[%c0_8, %c0_9] : memref<128x128xf32, #tpu.memory_space<vmem>>, vector<128x128xf32>
    %cst_10 = arith.constant dense<0.000000e+00> : vector<8x128xf32>
    %16 = tpu.matmul %14, %15, %cst_10 {dimension_numbers = #tpu.dot_dimension_numbers<[1], [0], [0], [1], [0, 0, 1, 1], [], []>} : vector<8x128xf32>, vector<128x128xf32>, vector<8x128xf32> -> vector<8x128xf32>
    %17 = vector.broadcast %7 : vector<1x128xf32> to vector<8x128xf32>
    %18 = arith.addf %16, %17 : vector<8x128xf32>
    %cst_11 = arith.constant 0.000000e+00 : f32
    %19 = vector.broadcast %cst_11 : f32 to vector<8x128xf32>
    %20 = arith.maximumf %18, %19 : vector<8x128xf32>
    %c0_12 = arith.constant 0 : index
    %c0_13 = arith.constant 0 : index
    %21 = vector.load %arg3[%c0_12, %c0_13] : memref<128x128xf32, #tpu.memory_space<vmem>>, vector<128x128xf32>
    %cst_14 = arith.constant dense<0.000000e+00> : vector<8x128xf32>
    %22 = tpu.matmul %20, %21, %cst_14 {dimension_numbers = #tpu.dot_dimension_numbers<[1], [0], [0], [1], [0, 0, 1, 1], [], []>} : vector<8x128xf32>, vector<128x128xf32>, vector<8x128xf32> -> vector<8x128xf32>
    %23 = vector.broadcast %8 : vector<1x128xf32> to vector<8x128xf32>
    %24 = arith.addf %22, %23 : vector<8x128xf32>
    %c0_15 = arith.constant 0 : index
    %c0_16 = arith.constant 0 : index
    %25 = vector.load %arg5[%c0_15, %c0_16] : memref<8x128xf32, #tpu.memory_space<vmem>>, vector<8x128xf32>
    tpu.vector_store %arg5[%c0_15, %c0_16], %24 {strides = array<i32>} : memref<8x128xf32, #tpu.memory_space<vmem>>, vector<8x128xf32>,
    return
  }
}

</mosaic_0001>

<llo_original>
// kernel: actor_forward.1
$region0: #{actor_forward.1}
  #allocation0 [shape = 'u32[]', space=smem, size = 0x4, offset = 0x4, fixed_abs, tag = 'smem constant byte address 0x4 - core index']
  #allocation1 [shape = 'u32[144,128]{1,0:T(1,128)}', space=vmem, size = 0x12000, scoped, tag = 'internal scratch']
  %s0 = inlined_call_operand.vmem [shape: f32[2,3], index: 0, kind: input, shape index: {}]
  %s1 = inlined_call_operand.hbm [shape: f32[128,128], index: 1, kind: input, shape index: {}]
  %s2 = inlined_call_operand.hbm [shape: f32[128,128], index: 2, kind: input, shape index: {}]
  %s3 = inlined_call_operand.hbm [shape: f32[128,128], index: 3, kind: input, shape index: {}]
  %s4 = inlined_call_operand.vmem [shape: f32[3,128], index: 4, kind: input, shape index: {}]
  %s5 = inlined_call_operand.vmem [shape: f32[8,128], index: 5, kind: output, shape index: {}]
  %s6 = sld [smem:[#allocation0]]
  $region42: #{actor_forward.1} parent=0
    _
  %s8 = ssub.s32 1, %s6
  %s9 = scalar_select 0, %s8, %s6
  $region1: #{actor_forward.1} parent=0
    #allocation2 [shape = 'u8[65536]{0}', space=vmem, size = 0x10000, scoped, tag = 'input window, operand 1, single buffered']
    #allocation3 [shape = 's32[1]{0}', space=sflag, size = 0x4, scoped, tag = 'scoped memory for actor_forward.1']
    #allocation4 [shape = 'u8[65536]{0}', space=vmem, size = 0x10000, scoped, tag = 'input window, operand 2, single buffered']
    #allocation5 [shape = 's32[1]{0}', space=sflag, size = 0x4, scoped, tag = 'scoped memory for actor_forward.1']
    #allocation6 [shape = 'u8[65536]{0}', space=vmem, size = 0x10000, scoped, tag = 'input window, operand 3, single buffered']
    %10 = vsyncpa [#allocation3], 0
    %11 = vsyncpa [#allocation5], 0
    // Predicated region
    $region2: #{actor_forward.1} parent=1 // pred_check
      _
    $region3: #{actor_forward.1} parent=1 // pred_check_branch
      %13 = sbr.rel (0) target = $region5
    $region4: #{actor_forward.1} parent=1 // pred_region
      _
    $region5: #{actor_forward.1} parent=1 // pred_fallthru
      _
    // Predicated region
    $region6: #{actor_forward.1} parent=1 // pred_check
      _
    $region7: #{actor_forward.1} parent=1 // pred_check_branch
      %15 = sbr.rel (0) target = $region9
    $region8: #{actor_forward.1} parent=1 // pred_region
      %s17 = ssub.s32 2048, 2048
      %18 = vsyncadd [#allocation3], %s17
      %s19 = sshll.u32 [#allocation2], 4
      %s20 = int_to_ptr.vmem [resolvable:$true] %s19
      %25 = dma.hbm_to_vmem [thread:$0]  %s1, 2048, %s20, [#allocation3], 128, 128, 8
    $region9: #{actor_forward.1} parent=1 // pred_fallthru
      _
    // Predicated region
    $region10: #{actor_forward.1} parent=1 // pred_check
      _
    $region11: #{actor_forward.1} parent=1 // pred_check_branch
      %27 = sbr.rel (0) target = $region13
    $region12: #{actor_forward.1} parent=1 // pred_region
      %s29 = ssub.s32 2048, 2048
      %30 = vsyncadd [#allocation5], %s29
      %s31 = sshll.u32 [#allocation4], 4
      %s32 = int_to_ptr.vmem [resolvable:$true] %s31
      %37 = dma.hbm_to_vmem [thread:$0]  %s2, 2048, %s32, [#allocation5], 128, 128, 8
    $region13: #{actor_forward.1} parent=1 // pred_fallthru
      _
    // Predicated region
    $region14: #{actor_forward.1} parent=1 // pred_check
      _
    $region15: #{actor_forward.1} parent=1 // pred_check_branch
      %39 = sbr.rel (0) target = $region17
    $region16: #{actor_forward.1} parent=1 // pred_region
      %s41 = ssub.s32 2048, 2048
      %42 = vsyncadd [#allocation5], %s41
      %s43 = sshll.u32 [#allocation6], 4
      %s44 = int_to_ptr.vmem [resolvable:$true] %s43
      %49 = dma.hbm_to_vmem [thread:$0]  %s3, 2048, %s44, [#allocation5], 128, 128, 8
    $region17: #{actor_forward.1} parent=1 // pred_fallthru
      _
    // Predicated region
    $region18: #{actor_forward.1} parent=1 // pred_check
      _
    $region19: #{actor_forward.1} parent=1 // pred_check_branch
      %51 = sbr.rel (0) target = $region21
    $region20: #{actor_forward.1} parent=1 // pred_region
      _
    $region21: #{actor_forward.1} parent=1 // pred_fallthru
      _
    // Predicated region
    $region22: #{actor_forward.1} parent=1 // pred_check
      _
    $region23: #{actor_forward.1} parent=1 // pred_check_branch
      %53 = sbr.rel (0) target = $region25
    $region24: #{actor_forward.1} parent=1 // pred_region
      %54 = dma.done [#allocation3], 2048
    $region25: #{actor_forward.1} parent=1 // pred_fallthru
      _
    // Predicated region
    $region26: #{actor_forward.1} parent=1 // pred_check
      _
    $region27: #{actor_forward.1} parent=1 // pred_check_branch
      %56 = sbr.rel (0) target = $region29
    $region28: #{actor_forward.1} parent=1 // pred_region
      %57 = dma.done [#allocation5], 2048
    $region29: #{actor_forward.1} parent=1 // pred_fallthru
      _
    // Predicated region
    $region30: #{actor_forward.1} parent=1 // pred_check
      _
    $region31: #{actor_forward.1} parent=1 // pred_check_branch
      %59 = sbr.rel (0) target = $region33
    $region32: #{actor_forward.1} parent=1 // pred_region
      %60 = dma.done [#allocation5], 2048
    $region33: #{actor_forward.1} parent=1 // pred_fallthru
      _
    %v61 = vld [vmem:[%s0] sm:$0x3]
    %vm62 = vcmask 1041408
    %v63 = vsel %vm62, %v61, 0.0
    %vm64 = vcmask 23552
    %v65 = vsel %vm64, %v63, 0.0
    %v66 = vld [vmem:[%s4] sm:$0x1]
    %v67 = vld [vmem:[%s4 + $0x1] sm:$0x1]
    %v68 = vld [vmem:[%s4 + $0x2] sm:$0x1]
    %v69 = vld [vmem:[#allocation2] sm:$0xff]
    %v70 = vld [vmem:[#allocation2 + $0x8] sm:$0xff]
    %v71 = vld [vmem:[#allocation2 + $0x10] sm:$0xff]
    %v72 = vld [vmem:[#allocation2 + $0x18] sm:$0xff]
    %v73 = vld [vmem:[#allocation2 + $0x20] sm:$0xff]
    %v74 = vld [vmem:[#allocation2 + $0x28] sm:$0xff]
    %v75 = vld [vmem:[#allocation2 + $0x30] sm:$0xff]
    %v76 = vld [vmem:[#allocation2 + $0x38] sm:$0xff]
    %v77 = vld [vmem:[#allocation2 + $0x40] sm:$0xff]
    %v78 = vld [vmem:[#allocation2 + $0x48] sm:$0xff]
    %v79 = vld [vmem:[#allocation2 + $0x50] sm:$0xff]
    %v80 = vld [vmem:[#allocation2 + $0x58] sm:$0xff]
    %v81 = vld [vmem:[#allocation2 + $0x60] sm:$0xff]
    %v82 = vld [vmem:[#allocation2 + $0x68] sm:$0xff]
    %v83 = vld [vmem:[#allocation2 + $0x70] sm:$0xff]
    %v84 = vld [vmem:[#allocation2 + $0x78] sm:$0xff]
    %v85 = vlaneseq
    %v86 = vshrl.u32 %v85, 7
    %v87 = vsub.s32 0, %v86
    %v88 = vrot.slane %v66, %v87
    %89 = vmatprep.subr.mxu0 0.0
    %90 = vmatpush1.msra.mxu0 %v69
    %91 = vmatprep.subr.mxu0 0.0
    %92 = vmatpush1.msra.mxu0 %v70
    %93 = vmatprep.subr.mxu0 0.0
    %94 = vmatpush1.msra.mxu0 %v71
    %95 = vmatprep.subr.mxu0 0.0
    %96 = vmatpush1.msra.mxu0 %v72
    %97 = vmatprep.subr.mxu0 0.0
    %98 = vmatpush1.msra.mxu0 %v73
    %99 = vmatprep.subr.mxu0 0.0
    %100 = vmatpush1.msra.mxu0 %v74
    %101 = vmatprep.subr.mxu0 0.0
    %102 = vmatpush1.msra.mxu0 %v75
    %103 = vmatprep.subr.mxu0 0.0
    %104 = vmatpush1.msra.mxu0 %v76
    %105 = vmatprep.subr.mxu0 0.0
    %106 = vmatpush1.msra.mxu0 %v77
    %107 = vmatprep.subr.mxu0 0.0
    %108 = vmatpush1.msra.mxu0 %v78
    %109 = vmatprep.subr.mxu0 0.0
    %110 = vmatpush1.msra.mxu0 %v79
    %111 = vmatprep.subr.mxu0 0.0
    %112 = vmatpush1.msra.mxu0 %v80
    %113 = vmatprep.subr.mxu0 0.0
    %114 = vmatpush1.msra.mxu0 %v81
    %115 = vmatprep.subr.mxu0 0.0
    %116 = vmatpush1.msra.mxu0 %v82
    %117 = vmatprep.subr.mxu0 0.0
    %118 = vmatpush1.msra.mxu0 %v83
    %119 = vmatprep.subr.mxu0 0.0
    %120 = vmatpush1.msra.mxu0 %v84
    %121 = vmatprep.subr.mxu0 0.0
    %122 = vmatpush1.msra.mxu0 0.0
    %123 = vmatprep.subr.mxu0 0.0
    %124 = vmatpush1.msra.mxu0 0.0
    %125 = vmatprep.subr.mxu0 0.0
    %126 = vmatpush1.msra.mxu0 0.0
    %127 = vmatprep.subr.mxu0 0.0
    %128 = vmatpush1.msra.mxu0 0.0
    %129 = vmatprep.subr.mxu0 0.0
    %130 = vmatpush1.msra.mxu0 0.0
    %131 = vmatprep.subr.mxu0 0.0
    %132 = vmatpush1.msra.mxu0 0.0
    %133 = vmatprep.subr.mxu0 0.0
    %134 = vmatpush1.msra.mxu0 0.0
    %135 = vmatprep.subr.mxu0 0.0
    %136 = vmatpush1.msra.mxu0 0.0
    %137 = vmatprep.subr.mxu0 0.0
    %138 = vmatpush1.msra.mxu0 0.0
    %139 = vmatprep.subr.mxu0 0.0
    %140 = vmatpush1.msra.mxu0 0.0
    %141 = vmatprep.subr.mxu0 0.0
    %142 = vmatpush1.msra.mxu0 0.0
    %143 = vmatprep.subr.mxu0 0.0
    %144 = vmatpush1.msra.mxu0 0.0
    %145 = vmatprep.subr.mxu0 0.0
    %146 = vmatpush1.msra.mxu0 0.0
    %147 = vmatprep.subr.mxu0 0.0
    %148 = vmatpush1.msra.mxu0 0.0
    %149 = vmatprep.subr.mxu0 0.0
    %150 = vmatpush1.msra.mxu0 0.0
    %151 = vmatprep.subr.mxu0 0.0
    %152 = vmatpush1.msra.mxu0 0.0
    %153 = vmatprep.mubr.f32.mxu0 0.0
    %154 = vmatmul.mubr.f32.gmra.mrb[0].mxu0 %v65
    %v155 = vpop.f32.mrb[0].mxu0
    %v156 = vadd.f32 %v88, %v155
    %v157 = vpop.f32.mrb[0].mxu0
    %158 = vdwg.mxu0
    %v159 = vmax.f32 %v156, 0.0
    %v160 = vld [vmem:[#allocation4] sm:$0xff]
    %v161 = vld [vmem:[#allocation4 + $0x8] sm:$0xff]
    %v162 = vld [vmem:[#allocation4 + $0x10] sm:$0xff]
    %v163 = vld [vmem:[#allocation4 + $0x18] sm:$0xff]
    %v164 = vld [vmem:[#allocation4 + $0x20] sm:$0xff]
    %v165 = vld [vmem:[#allocation4 + $0x28] sm:$0xff]
    %v166 = vld [vmem:[#allocation4 + $0x30] sm:$0xff]
    %v167 = vld [vmem:[#allocation4 + $0x38] sm:$0xff]
    %v168 = vld [vmem:[#allocation4 + $0x40] sm:$0xff]
    %v169 = vld [vmem:[#allocation4 + $0x48] sm:$0xff]
    %v170 = vld [vmem:[#allocation4 + $0x50] sm:$0xff]
    %v171 = vld [vmem:[#allocation4 + $0x58] sm:$0xff]
    %v172 = vld [vmem:[#allocation4 + $0x60] sm:$0xff]
    %v173 = vld [vmem:[#allocation4 + $0x68] sm:$0xff]
    %v174 = vld [vmem:[#allocation4 + $0x70] sm:$0xff]
    %v175 = vld [vmem:[#allocation4 + $0x78] sm:$0xff]
    %v176 = vlaneseq
    %v177 = vshrl.u32 %v176, 7
    %v178 = vsub.s32 0, %v177
    %v179 = vrot.slane %v67, %v178
    %180 = vmatprep.subr.mxu0 0.0
    %181 = vmatpush1.msra.mxu0 %v160
    %182 = vmatprep.subr.mxu0 0.0
    %183 = vmatpush1.msra.mxu0 %v161
    %184 = vmatprep.subr.mxu0 0.0
    %185 = vmatpush1.msra.mxu0 %v162
    %186 = vmatprep.subr.mxu0 0.0
    %187 = vmatpush1.msra.mxu0 %v163
    %188 = vmatprep.subr.mxu0 0.0
    %189 = vmatpush1.msra.mxu0 %v164
    %190 = vmatprep.subr.mxu0 0.0
    %191 = vmatpush1.msra.mxu0 %v165
    %192 = vmatprep.subr.mxu0 0.0
    %193 = vmatpush1.msra.mxu0 %v166
    %194 = vmatprep.subr.mxu0 0.0
    %195 = vmatpush1.msra.mxu0 %v167
    %196 = vmatprep.subr.mxu0 0.0
    %197 = vmatpush1.msra.mxu0 %v168
    %198 = vmatprep.subr.mxu0 0.0
    %199 = vmatpush1.msra.mxu0 %v169
    %200 = vmatprep.subr.mxu0 0.0
    %201 = vmatpush1.msra.mxu0 %v170
    %202 = vmatprep.subr.mxu0 0.0
    %203 = vmatpush1.msra.mxu0 %v171
    %204 = vmatprep.subr.mxu0 0.0
    %205 = vmatpush1.msra.mxu0 %v172
    %206 = vmatprep.subr.mxu0 0.0
    %207 = vmatpush1.msra.mxu0 %v173
    %208 = vmatprep.subr.mxu0 0.0
    %209 = vmatpush1.msra.mxu0 %v174
    %210 = vmatprep.subr.mxu0 0.0
    %211 = vmatpush1.msra.mxu0 %v175
    %212 = vmatprep.subr.mxu0 0.0
    %213 = vmatpush1.msra.mxu0 0.0
    %214 = vmatprep.subr.mxu0 0.0
    %215 = vmatpush1.msra.mxu0 0.0
    %216 = vmatprep.subr.mxu0 0.0
    %217 = vmatpush1.msra.mxu0 0.0
    %218 = vmatprep.subr.mxu0 0.0
    %219 = vmatpush1.msra.mxu0 0.0
    %220 = vmatprep.subr.mxu0 0.0
    %221 = vmatpush1.msra.mxu0 0.0
    %222 = vmatprep.subr.mxu0 0.0
    %223 = vmatpush1.msra.mxu0 0.0
    %224 = vmatprep.subr.mxu0 0.0
    %225 = vmatpush1.msra.mxu0 0.0
    %226 = vmatprep.subr.mxu0 0.0
    %227 = vmatpush1.msra.mxu0 0.0
    %228 = vmatprep.subr.mxu0 0.0
    %229 = vmatpush1.msra.mxu0 0.0
    %230 = vmatprep.subr.mxu0 0.0
    %231 = vmatpush1.msra.mxu0 0.0
    %232 = vmatprep.subr.mxu0 0.0
    %233 = vmatpush1.msra.mxu0 0.0
    %234 = vmatprep.subr.mxu0 0.0
    %235 = vmatpush1.msra.mxu0 0.0
    %236 = vmatprep.subr.mxu0 0.0
    %237 = vmatpush1.msra.mxu0 0.0
    %238 = vmatprep.subr.mxu0 0.0
    %239 = vmatpush1.msra.mxu0 0.0
    %240 = vmatprep.subr.mxu0 0.0
    %241 = vmatpush1.msra.mxu0 0.0
    %242 = vmatprep.subr.mxu0 0.0
    %243 = vmatpush1.msra.mxu0 0.0
    %244 = vmatprep.mubr.f32.mxu0 0.0
    %245 = vmatmul.mubr.f32.gmra.mrb[0].mxu0 %v159
    %v246 = vpop.f32.mrb[0].mxu0
    %v247 = vadd.f32 %v179, %v246
    %v248 = vpop.f32.mrb[0].mxu0
    %249 = vdwg.mxu0
    %v250 = vmax.f32 %v247, 0.0
    %v251 = vld [vmem:[#allocation6] sm:$0xff]
    %v252 = vld [vmem:[#allocation6 + $0x8] sm:$0xff]
    %v253 = vld [vmem:[#allocation6 + $0x10] sm:$0xff]
    %v254 = vld [vmem:[#allocation6 + $0x18] sm:$0xff]
    %v255 = vld [vmem:[#allocation6 + $0x20] sm:$0xff]
    %v256 = vld [vmem:[#allocation6 + $0x28] sm:$0xff]
    %v257 = vld [vmem:[#allocation6 + $0x30] sm:$0xff]
    %v258 = vld [vmem:[#allocation6 + $0x38] sm:$0xff]
    %v259 = vld [vmem:[#allocation6 + $0x40] sm:$0xff]
    %v260 = vld [vmem:[#allocation6 + $0x48] sm:$0xff]
    %v261 = vld [vmem:[#allocation6 + $0x50] sm:$0xff]
    %v262 = vld [vmem:[#allocation6 + $0x58] sm:$0xff]
    %v263 = vld [vmem:[#allocation6 + $0x60] sm:$0xff]
    %v264 = vld [vmem:[#allocation6 + $0x68] sm:$0xff]
    %v265 = vld [vmem:[#allocation6 + $0x70] sm:$0xff]
    %v266 = vld [vmem:[#allocation6 + $0x78] sm:$0xff]
    %v267 = vlaneseq
    %v268 = vshrl.u32 %v267, 7
    %v269 = vsub.s32 0, %v268
    %v270 = vrot.slane %v68, %v269
    %271 = vmatprep.subr.mxu0 0.0
    %272 = vmatpush1.msra.mxu0 %v251
    %273 = vmatprep.subr.mxu0 0.0
    %274 = vmatpush1.msra.mxu0 %v252
    %275 = vmatprep.subr.mxu0 0.0
    %276 = vmatpush1.msra.mxu0 %v253
    %277 = vmatprep.subr.mxu0 0.0
    %278 = vmatpush1.msra.mxu0 %v254
    %279 = vmatprep.subr.mxu0 0.0
    %280 = vmatpush1.msra.mxu0 %v255
    %281 = vmatprep.subr.mxu0 0.0
    %282 = vmatpush1.msra.mxu0 %v256
    %283 = vmatprep.subr.mxu0 0.0
    %284 = vmatpush1.msra.mxu0 %v257
    %285 = vmatprep.subr.mxu0 0.0
    %286 = vmatpush1.msra.mxu0 %v258
    %287 = vmatprep.subr.mxu0 0.0
    %288 = vmatpush1.msra.mxu0 %v259
    %289 = vmatprep.subr.mxu0 0.0
    %290 = vmatpush1.msra.mxu0 %v260
    %291 = vmatprep.subr.mxu0 0.0
    %292 = vmatpush1.msra.mxu0 %v261
    %293 = vmatprep.subr.mxu0 0.0
    %294 = vmatpush1.msra.mxu0 %v262
    %295 = vmatprep.subr.mxu0 0.0
    %296 = vmatpush1.msra.mxu0 %v263
    %297 = vmatprep.subr.mxu0 0.0
    %298 = vmatpush1.msra.mxu0 %v264
    %299 = vmatprep.subr.mxu0 0.0
    %300 = vmatpush1.msra.mxu0 %v265
    %301 = vmatprep.subr.mxu0 0.0
    %302 = vmatpush1.msra.mxu0 %v266
    %303 = vmatprep.subr.mxu0 0.0
    %304 = vmatpush1.msra.mxu0 0.0
    %305 = vmatprep.subr.mxu0 0.0
    %306 = vmatpush1.msra.mxu0 0.0
    %307 = vmatprep.subr.mxu0 0.0
    %308 = vmatpush1.msra.mxu0 0.0
    %309 = vmatprep.subr.mxu0 0.0
    %310 = vmatpush1.msra.mxu0 0.0
    %311 = vmatprep.subr.mxu0 0.0
    %312 = vmatpush1.msra.mxu0 0.0
    %313 = vmatprep.subr.mxu0 0.0
    %314 = vmatpush1.msra.mxu0 0.0
    %315 = vmatprep.subr.mxu0 0.0
    %316 = vmatpush1.msra.mxu0 0.0
    %317 = vmatprep.subr.mxu0 0.0
    %318 = vmatpush1.msra.mxu0 0.0
    %319 = vmatprep.subr.mxu0 0.0
    %320 = vmatpush1.msra.mxu0 0.0
    %321 = vmatprep.subr.mxu0 0.0
    %322 = vmatpush1.msra.mxu0 0.0
    %323 = vmatprep.subr.mxu0 0.0
    %324 = vmatpush1.msra.mxu0 0.0
    %325 = vmatprep.subr.mxu0 0.0
    %326 = vmatpush1.msra.mxu0 0.0
    %327 = vmatprep.subr.mxu0 0.0
    %328 = vmatpush1.msra.mxu0 0.0
    %329 = vmatprep.subr.mxu0 0.0
    %330 = vmatpush1.msra.mxu0 0.0
    %331 = vmatprep.subr.mxu0 0.0
    %332 = vmatpush1.msra.mxu0 0.0
    %333 = vmatprep.subr.mxu0 0.0
    %334 = vmatpush1.msra.mxu0 0.0
    %335 = vmatprep.mubr.f32.mxu0 0.0
    %336 = vmatmul.mubr.f32.gmra.mrb[0].mxu0 %v250
    %v337 = vpop.f32.mrb[0].mxu0
    %v338 = vadd.f32 %v270, %v337
    %v339 = vpop.f32.mrb[0].mxu0
    %340 = vdwg.mxu0
    %341 = vst [vmem:[%s5] sm:$0xff] %v338
    // Predicated region
    $region34: #{actor_forward.1} parent=1 // pred_check
      _
    $region35: #{actor_forward.1} parent=1 // pred_check_branch
      %343 = sbr.rel (0) target = $region37
    $region36: #{actor_forward.1} parent=1 // pred_region
      _
    $region37: #{actor_forward.1} parent=1 // pred_fallthru
      _
    // Predicated region
    $region38: #{actor_forward.1} parent=1 // pred_check
      _
    $region39: #{actor_forward.1} parent=1 // pred_check_branch
      %345 = sbr.rel (0) target = $region41
    $region40: #{actor_forward.1} parent=1 // pred_region
      _
    $region41: #{actor_forward.1} parent=1 // pred_fallthru
      _
    %346 = vsyncpa [#allocation3], 1
    %347 = vsyncpa [#allocation5], 1

</llo_original>
